<compile_context>
chip_gen: v7x
topology: tpu7x:2x2x1
jax: 0.10.0
libtpu: 0.0.40
codegen_flags: <defaults>
</compile_context>

<pallas_src>
import jax
import jax.numpy as jnp
from jax import lax
from jax.experimental import pallas as pl
from jax.experimental.pallas import tpu as pltpu


# ---------------------------------------------------------------------------
# Kernels
# ---------------------------------------------------------------------------

def _cam_attn_kernel(gamma_ref, x_ref, attn_ref, energy_acc):
    """Pass 1 (two-pass path): accumulate energy = x @ x^T over N tiles, then
    softmax(rowmax(E)-E) == exp(rowmin(E)-E)/sum and fold gamma in."""
    n = pl.program_id(1)

    @pl.when(n == 0)
    def _():
        energy_acc[...] = jnp.zeros_like(energy_acc)

    xb = x_ref[...]  # (C, tn), native dtype
    # energy += x_tile @ x_tile^T; contraction on last dims, f32 accumulation.
    energy_acc[...] += lax.dot_general(
        xb, xb,
        dimension_numbers=(((1,), (1,)), ((), ())),
        preferred_element_type=jnp.float32)

    @pl.when(n == pl.num_programs(1) - 1)
    def _():
        energy = energy_acc[...]  # (C, C) f32
        # softmax(rowmax(E) - E) == exp(rowmin(E) - E) / sum(...): one row
        # reduction, max exponent is 0.  Exact divide (runs once per batch).
        min_e = jnp.min(energy, axis=-1, keepdims=True)
        exp_e = jnp.exp(min_e - energy)
        attn = exp_e / jnp.sum(exp_e, axis=-1, keepdims=True)
        # Fold gamma into the (C, C) attention: C*C multiplies instead of C*N.
        attn_ref[...] = (gamma_ref[0] * attn).astype(attn_ref.dtype)


def _cam_out_kernel(attn_ref, x_ref, o_ref):
    """Pass 2 (two-pass path): out[:, tile] = attn_scaled @ x[:, tile] + x."""
    xb = x_ref[...]  # (C, tn), native dtype
    out = jnp.dot(attn_ref[...], xb, preferred_element_type=jnp.float32)
    o_ref[...] = (out + xb.astype(jnp.float32)).astype(o_ref.dtype)


def _cam_fused_kernel(gamma_ref, x_ref, o_ref):
    """Fused path: x for one batch is resident in VMEM; compute energy,
    softmax, and the output in a single pass (x read once, out written once)."""
    xb = x_ref[...]  # (C, N_pad), native dtype
    energy = lax.dot_general(
        xb, xb,
        dimension_numbers=(((1,), (1,)), ((), ())),
        preferred_element_type=jnp.float32)
    min_e = jnp.min(energy, axis=-1, keepdims=True)
    exp_e = jnp.exp(min_e - energy)
    attn = exp_e / jnp.sum(exp_e, axis=-1, keepdims=True)
    attn = (gamma_ref[0] * attn).astype(xb.dtype)
    out = jnp.dot(attn, xb, preferred_element_type=jnp.float32)
    o_ref[...] = (out + xb.astype(jnp.float32)).astype(o_ref.dtype)


# ---------------------------------------------------------------------------
# Wrapper
# ---------------------------------------------------------------------------

def cam_module_forward(x, gamma, *, compute_dtype=None,
                       max_fused_vmem_bytes=24 << 20):
    """x: (B, C, H, W), gamma: (1,) float32 -> (B, C, H, W).

    compute_dtype: optionally cast x once (e.g. jnp.bfloat16) to halve HBM
      bytes on mem-bound chips; None keeps the input dtype (exact).
    max_fused_vmem_bytes: VMEM budget gate for the fused single-pass path;
      set to 0 to force the two-pass N-tiled path.
    """
    B, C, H, W = x.shape
    N = H * W

    x_flat = x.reshape(B, C, N)
    if compute_dtype is not None and x_flat.dtype != jnp.dtype(compute_dtype):
        x_flat = x_flat.astype(compute_dtype)
    itemsize = jnp.dtype(x_flat.dtype).itemsize

    # ---- Tile selection: target-first, then balance across ceil(N/target)
    # tiles (never degenerates to 128 for awkward N; padding is exact). ----
    target_tn = 2048 if itemsize <= 2 else 1024
    # Cap tn so double-buffered (in + out) pass-2 tiles stay within ~24 MiB.
    cap = max(512, ((24 << 20) // max(4 * C * itemsize, 1)) // 128 * 128)
    target_tn = min(target_tn, cap)
    n_tiles = pl.cdiv(N, target_tn)
    tn = pl.cdiv(pl.cdiv(N, n_tiles), 128) * 128
    N_pad = tn * n_tiles

    if N_pad != N:
        # Zero padding along N is exact: it contributes 0 to the energy matmul
        # and the padded output columns are sliced off below.
        x_flat = jnp.pad(x_flat, ((0, 0), (0, 0), (0, N_pad - N)))

    gamma = gamma.astype(jnp.float32)

    # ---- Fused single-pass path: x resident in VMEM per batch. ----
    fused_vmem = (4 * C * N_pad * itemsize    # in + out, double-buffered
                  + 4 * C * C * 4             # energy / exp / attn temporaries
                  + (2 << 20))
    if fused_vmem <= max_fused_vmem_bytes:
        out_flat = pl.pallas_call(
            _cam_fused_kernel,
            out_shape=jax.ShapeDtypeStruct((B, C, N_pad), x_flat.dtype),
            grid_spec=pltpu.PrefetchScalarGridSpec(
                num_scalar_prefetch=0,
                grid=(B,),
                in_specs=[
                    pl.BlockSpec(memory_space=pltpu.MemorySpace.SMEM),  # gamma
                    pl.BlockSpec((None, C, N_pad), lambda b: (b, 0, 0)),
                ],
                out_specs=pl.BlockSpec((None, C, N_pad), lambda b: (b, 0, 0)),
            ),
            compiler_params=pltpu.CompilerParams(
                dimension_semantics=("parallel",),
                vmem_limit_bytes=int(min(max(fused_vmem, 16 << 20), 48 << 20))),
        )(gamma, x_flat)
    else:
        # ---- Two-pass N-tiled path (bounded VMEM at any shape). ----
        # Pass 1: gamma-scaled channel attention (B, C, C).
        vmem1 = (2 * C * tn * itemsize + 2 * C * C * itemsize
                 + 6 * C * C * 4 + (1 << 20))
        attn = pl.pallas_call(
            _cam_attn_kernel,
            out_shape=jax.ShapeDtypeStruct((B, C, C), x_flat.dtype),
            grid_spec=pltpu.PrefetchScalarGridSpec(
                num_scalar_prefetch=0,
                grid=(B, n_tiles),
                in_specs=[
                    pl.BlockSpec(memory_space=pltpu.MemorySpace.SMEM),   # gamma
                    pl.BlockSpec((None, C, tn), lambda b, n: (b, 0, n)),  # x tile
                ],
                out_specs=pl.BlockSpec((None, C, C), lambda b, n: (b, 0, 0)),
                scratch_shapes=[pltpu.VMEM((C, C), jnp.float32)],
            ),
            compiler_params=pltpu.CompilerParams(
                dimension_semantics=("parallel", "arbitrary"),
                vmem_limit_bytes=int(min(max(vmem1, 16 << 20), 48 << 20))),
        )(gamma, x_flat)

        # Pass 2: out = attn @ x + x, tiled over N (lane-dense stores).
        vmem2 = (2 * C * C * itemsize + 4 * C * tn * itemsize
                 + 3 * C * tn * 4 + (1 << 20))
        out_flat = pl.pallas_call(
            _cam_out_kernel,
            out_shape=jax.ShapeDtypeStruct((B, C, N_pad), x_flat.dtype),
            grid_spec=pltpu.PrefetchScalarGridSpec(
                num_scalar_prefetch=0,
                grid=(B, n_tiles),
                in_specs=[
                    pl.BlockSpec((None, C, C), lambda b, n: (b, 0, 0)),   # attn
                    pl.BlockSpec((None, C, tn), lambda b, n: (b, 0, n)),  # x tile
                ],
                out_specs=pl.BlockSpec((None, C, tn), lambda b, n: (b, 0, n)),
            ),
            compiler_params=pltpu.CompilerParams(
                dimension_semantics=("parallel", "parallel"),
                vmem_limit_bytes=int(min(max(vmem2, 16 << 20), 48 << 20))),
        )(attn, x_flat)

    if N_pad != N:
        out_flat = out_flat[:, :, :N]
    return out_flat.reshape(B, C, H, W).astype(x.dtype)


# ---------------------------------------------------------------------------
# Pure-JAX reference mirroring the PyTorch forward
# ---------------------------------------------------------------------------

def cam_module_ref(x, gamma):
    B, C, H, W = x.shape
    xf = x.reshape(B, C, H * W).astype(jnp.float32)
    energy = jnp.einsum("bcn,bdn->bcd", xf, xf)
    max_e = jnp.max(energy, axis=-1, keepdims=True)
    energy_new = max_e - energy
    attn = jax.nn.softmax(energy_new, axis=-1)
    out = jnp.einsum("bcd,bdn->bcn", attn, xf)
    out = out.reshape(B, C, H, W)
    return (gamma[0] * out + x.astype(jnp.float32)).astype(x.dtype)


if __name__ == "__main__":
    key = jax.random.PRNGKey(0)
    B, C, H, W = 2, 4, 16, 16
    x = jax.random.normal(key, (B, C, H, W), dtype=jnp.float32)

    gamma0 = jnp.zeros((1,), dtype=jnp.float32)   # CAM_Module init (zeros(1))
    gamma1 = jnp.array([0.5], dtype=jnp.float32)  # exercises the attention path

    for g in (gamma0, gamma1):
        ref = cam_module_ref(x, g)

        # Fused (x-resident) path.
        out_fused = cam_module_forward(x, g)
        jax.block_until_ready(out_fused)
        assert jnp.allclose(out_fused, ref, atol=1e-4, rtol=1e-4), \
            "fused path mismatch vs reference"

        # Two-pass N-tiled path (forced by disabling fusion).
        out_tiled = cam_module_forward(x, g, max_fused_vmem_bytes=0)
        jax.block_until_ready(out_tiled)
        assert jnp.allclose(out_tiled, ref, atol=1e-4, rtol=1e-4), \
            "two-pass path mismatch vs reference"

    print("KERNEL_OK")
</pallas_src>

<mosaic_0001>
module attributes {stable_mosaic.version = 11 : i64} {
  func.func @_cam_fused_kernel(%arg0: i32, %arg1: memref<1xf32, #tpu.memory_space<smem>>, %arg2: memref<1x4x256xf32, #tpu.memory_space<vmem>>, %arg3: memref<1x4x256xf32, #tpu.memory_space<vmem>>) attributes {dimension_semantics = [#tpu.dimension_semantics<parallel>], iteration_bounds = array<i64: 2>, scalar_prefetch = 0 : i64, scratch_operands = 0 : i64, tpu.core_type = #tpu.core_type<tc>, window_params = [{transform_indices = @transform_0, window_bounds = array<i64: 1>}, {transform_indices = @transform_1, window_bounds = array<i64: 1, 4, 256>}, {transform_indices = @transform_2, window_bounds = array<i64: 1, 4, 256>}]} {
    %c0 = arith.constant 0 : index
    %c0_0 = arith.constant 0 : index
    %c0_1 = arith.constant 0 : index
    %0 = vector.load %arg2[%c0, %c0_0, %c0_1] : memref<1x4x256xf32, #tpu.memory_space<vmem>>, vector<1x4x256xf32>
    %1 = vector.shape_cast %0 : vector<1x4x256xf32> to vector<4x256xf32>
    %cst = arith.constant dense<0.000000e+00> : vector<4x4xf32>
    %2 = tpu.matmul %1, %1, %cst {dimension_numbers = #tpu.dot_dimension_numbers<[1], [1], [0], [0], [0, 0, 1, 0], [], []>} : vector<4x256xf32>, vector<4x256xf32>, vector<4x4xf32> -> vector<4x4xf32>
    %cst_2 = arith.constant dense<0x7F800000> : vector<4xf32>
    %3 = vector.multi_reduction <minimumf>, %2, %cst_2 [1] : vector<4x4xf32> to vector<4xf32>
    %4 = vector.shape_cast %3 : vector<4xf32> to vector<4x1xf32>
    %5 = vector.broadcast %4 : vector<4x1xf32> to vector<4x4xf32>
    %6 = arith.subf %5, %2 : vector<4x4xf32>
    %7 = math.exp %6 : vector<4x4xf32>
    %cst_3 = arith.constant dense<0.000000e+00> : vector<4xf32>
    %8 = vector.multi_reduction <add>, %7, %cst_3 [1] : vector<4x4xf32> to vector<4xf32>
    %9 = vector.shape_cast %8 : vector<4xf32> to vector<4x1xf32>
    %10 = vector.broadcast %9 : vector<4x1xf32> to vector<4x4xf32>
    %11 = arith.divf %7, %10 : vector<4x4xf32>
    %c0_4 = arith.constant 0 : index
    %12 = memref.load %arg1[%c0_4] : memref<1xf32, #tpu.memory_space<smem>>
    %13 = vector.broadcast %12 : f32 to vector<4x4xf32>
    %14 = arith.mulf %13, %11 : vector<4x4xf32>
    %cst_5 = arith.constant dense<0.000000e+00> : vector<4x256xf32>
    %15 = tpu.matmul %14, %1, %cst_5 {dimension_numbers = #tpu.dot_dimension_numbers<[1], [0], [0], [1], [0, 0, 1, 1], [], []>} : vector<4x4xf32>, vector<4x256xf32>, vector<4x256xf32> -> vector<4x256xf32>
    %16 = arith.addf %15, %1 : vector<4x256xf32>
    %c0_6 = arith.constant 0 : index
    %c0_7 = arith.constant 0 : index
    %c0_8 = arith.constant 0 : index
    %17 = vector.load %arg3[%c0_6, %c0_7, %c0_8] : memref<1x4x256xf32, #tpu.memory_space<vmem>>, vector<1x4x256xf32>
    %18 = vector.shape_cast %17 : vector<1x4x256xf32> to vector<4x256xf32>
    %19 = vector.shape_cast %16 : vector<4x256xf32> to vector<1x4x256xf32>
    tpu.vector_store %arg3[%c0_6, %c0_7, %c0_8], %19 {strides = array<i32>} : memref<1x4x256xf32, #tpu.memory_space<vmem>>, vector<1x4x256xf32>,
    return
  }
  func.func @transform_0(%arg0: i32) -> i32 {
    %c0_i32 = arith.constant 0 : i32
    %c0_i32_0 = arith.constant 0 : i32
    return %c0_i32 : i32
  }
  func.func @transform_1(%arg0: i32) -> (i32, i32, i32) {
    %c0_i32 = arith.constant 0 : i32
    %c0_i32_0 = arith.constant 0 : i32
    %c0_i32_1 = arith.constant 0 : i32
    return %arg0, %c0_i32, %c0_i32_0 : i32, i32, i32
  }
  func.func @transform_2(%arg0: i32) -> (i32, i32, i32) {
    %c0_i32 = arith.constant 0 : i32
    %c0_i32_0 = arith.constant 0 : i32
    %c0_i32_1 = arith.constant 0 : i32
    return %arg0, %c0_i32, %c0_i32_0 : i32, i32, i32
  }
}

</mosaic_0001>

<llo_original>
// kernel: tpu_custom_call.1
$region0: #{tpu_custom_call.1}
  #allocation0 [shape = 'u32[]', space=smem, size = 0x4, offset = 0x4, fixed_abs, tag = 'smem constant byte address 0x4 - core index']
  #allocation1 [shape = 'u32[144,128]{1,0:T(1,128)}', space=vmem, size = 0x12000, scoped, tag = 'internal scratch']
  #allocation2 [shape = 'f32[1]{0:T(128)S(6)}', space=smem, size = 0x200, scoped, tag = 'scoped memory for tpu_custom_call.1']
  %s0 = inlined_call_operand.<no memory space> [shape: f32[1], index: 0, kind: input, shape index: {}]
  %s1 = inlined_call_operand.hbm [shape: f32[2,4,256], index: 1, kind: input, shape index: {}]
  %s2 = inlined_call_operand.hbm [shape: f32[2,4,256], index: 2, kind: output, shape index: {}]
  %s3 = sld [smem:[#allocation0]]
  $region45: #{tpu_custom_call.1} parent=0
    _
  %s5 = ssub.s32 1, %s3
  %s6 = scalar_select 0, %s5, %s3
  %7 = sst [smem:[#allocation2]] %s0
  $region1: #{tpu_custom_call.1} parent=0
    #allocation3 [shape = 'u8[8192]{0}', space=vmem, size = 0x2000, scoped, tag = 'input window, operand 1']
    #allocation4 [shape = 's32[2]{0}', space=sflag, size = 0x8, scoped, tag = 'scoped memory for tpu_custom_call.1']
    #allocation5 [shape = 's32[2]{0}', space=sflag, size = 0x8, scoped, tag = 'scoped memory for tpu_custom_call.1']
    #allocation6 [shape = 'u8[8192]{0}', space=vmem, size = 0x2000, scoped, tag = 'output window, operand 0']
    %8 = vsyncpa [#allocation4], 0
    %s9 = scalar_lea.sflag [#allocation4], 1
    %10 = vsyncpa %s9, 0
    %11 = vsyncpa [#allocation5], 0
    %s12 = scalar_lea.sflag [#allocation5], 1
    %13 = vsyncpa %s12, 0
    loop: start=0, step=1, limit=4
    $region2: #{tpu_custom_call.1} parent=1 // loop_pre_header
      _
    $region3: #{tpu_custom_call.1} parent=1 // loop_header
      %s15 = sphi 0, %s19
      %p16 = scmp.ge.s32.totalorder %s15, 4
      %s23 = sphi 0, %s23
      %s25 = sphi 0, %s23
      %s26 = sphi 0, %s25
      %s40 = sphi 0, %s26
      %s46 = sphi 0, %s48
      %s49 = sphi 0, %s46
      %s50 = sphi 0, %s49
      %s66 = sphi 0, %s50
      %s72 = sphi 0, %s74
      %s75 = sphi 0, %s72
      %s76 = sphi 0, %s75
      %s92 = sphi 0, %s76
    $region4: #{tpu_custom_call.1} parent=1 // loop_header_branch
      %18 = sbr.rel (%p16) target = $region8
    $region5: #{tpu_custom_call.1} parent=1 // loop_body
      %s20 = ssub.s32 %s15, 1
      %s21 = ssub.s32 %s15, 2
      %s22 = sadd.s32 %s15, 1
      %s24 = sadd.s32 %s23, 1
      %p27 = scmp.eq.s32.totalorder %s15, 1
      %p28 = scmp.ne.s32.totalorder %s23, %s25
      %p29 = scmp.eq.s32.totalorder %s15, 0
      %p30 = por %p28, %p29
      %p31 = scmp.ne.s32.totalorder %s23, %s25
      %p32 = scmp.eq.s32.totalorder %s20, 1
      %p33 = por %p31, %p32
      %p34 = scmp.ne.s32.totalorder %s25, %s26
      %p35 = scmp.eq.s32.totalorder %s20, 0
      %p36 = por %p34, %p35
      %p37 = scmp.ne.s32.totalorder %s25, %s26
      %p38 = scmp.eq.s32.totalorder %s21, 1
      %p39 = por %p37, %p38
      %p41 = scmp.ne.s32.totalorder %s26, %s40
      %p42 = scmp.eq.s32.totalorder %s21, 0
      %p43 = por %p41, %p42
      %s44 = ssub.s32 %s15, %s22
      %p45 = scmp.eq.s32.totalorder %s44, 0
      %s47 = sadd.s32 %s46, 1
      %s48 = scalar_select %p45, %s46, %s47
      %p51 = pneg %p45
      %p52 = scmp.eq.s32.totalorder %s15, 1
      %p53 = por %p51, %p52
      %p54 = scmp.ne.s32.totalorder %s46, %s49
      %p55 = scmp.eq.s32.totalorder %s15, 0
      %p56 = por %p54, %p55
      %p57 = scmp.ne.s32.totalorder %s46, %s49
      %p58 = scmp.eq.s32.totalorder %s20, 1
      %p59 = por %p57, %p58
      %p60 = scmp.ne.s32.totalorder %s49, %s50
      %p61 = scmp.eq.s32.totalorder %s20, 0
      %p62 = por %p60, %p61
      %p63 = scmp.ne.s32.totalorder %s49, %s50
      %p64 = scmp.eq.s32.totalorder %s21, 1
      %p65 = por %p63, %p64
      %p67 = scmp.ne.s32.totalorder %s50, %s66
      %p68 = scmp.eq.s32.totalorder %s21, 0
      %p69 = por %p67, %p68
      %s70 = ssub.s32 %s15, %s22
      %p71 = scmp.eq.s32.totalorder %s70, 0
      %s73 = sadd.s32 %s72, 1
      %s74 = scalar_select %p71, %s72, %s73
      %p77 = pneg %p71
      %p78 = scmp.eq.s32.totalorder %s15, 1
      %p79 = por %p77, %p78
      %p80 = scmp.ne.s32.totalorder %s72, %s75
      %p81 = scmp.eq.s32.totalorder %s15, 0
      %p82 = por %p80, %p81
      %p83 = scmp.ne.s32.totalorder %s72, %s75
      %p84 = scmp.eq.s32.totalorder %s20, 1
      %p85 = por %p83, %p84
      %p86 = scmp.ne.s32.totalorder %s75, %s76
      %p87 = scmp.eq.s32.totalorder %s20, 0
      %p88 = por %p86, %p87
      %p89 = scmp.ne.s32.totalorder %s75, %s76
      %p90 = scmp.eq.s32.totalorder %s21, 1
      %p91 = por %p89, %p90
      %p93 = scmp.ne.s32.totalorder %s76, %s92
      %p94 = scmp.eq.s32.totalorder %s21, 0
      %p95 = por %p93, %p94
      %p96 = scmp.le.s32.totalorder 1, %s15
      %p97 = scmp.lt.s32.totalorder %s15, 3
      %p98 = pnand %p96, %p97
      %p99 = pneg %p98
      // Predicated region
      $region9: #{tpu_custom_call.1} parent=5 // pred_check
        _
      $region10: #{tpu_custom_call.1} parent=5 // pred_check_branch
        %101 = sbr.rel (%p98) target = $region12
      $region11: #{tpu_custom_call.1} parent=5 // pred_region
        %s102 = ssub.s32 %s15, 1
        // Predicated region
        $region13: #{tpu_custom_call.1} parent=11 // pred_check
          %p103 = pneg %p36
        $region14: #{tpu_custom_call.1} parent=11 // pred_check_branch
          %105 = sbr.rel (%p103) target = $region16
        $region15: #{tpu_custom_call.1} parent=11 // pred_region
          _
        $region16: #{tpu_custom_call.1} parent=11 // pred_fallthru
          _
      $region12: #{tpu_custom_call.1} parent=5 // pred_fallthru
        _
      %p106 = scmp.lt.s32.totalorder %s15, 2
      // Predicated region
      $region17: #{tpu_custom_call.1} parent=5 // pred_check
        %p107 = pneg %p106
      $region18: #{tpu_custom_call.1} parent=5 // pred_check_branch
        %109 = sbr.rel (%p107) target = $region20
      $region19: #{tpu_custom_call.1} parent=5 // pred_region
        // Predicated region
        $region21: #{tpu_custom_call.1} parent=19 // pred_check
          %p110 = pneg %p56
        $region22: #{tpu_custom_call.1} parent=19 // pred_check_branch
          %112 = sbr.rel (%p110) target = $region24
        $region23: #{tpu_custom_call.1} parent=19 // pred_region
          %s113 = sand.u32 %s46, 1
          %s114 = scalar_lea.sflag [#allocation4], %s113
          %s115 = sand.u32 %s46, 1
          %s116 = smul.addr %s115, 8
          %s117 = scalar_lea.vmem [#allocation3], %s116
          %s119 = ssub.s32 128, 128
          %120 = vsyncadd %s114, %s119
          %s121 = smul.addr %s15, 2
          %s122 = smul.addr %s121, 64
          %s123 = scalar_lea.hbm %s1, %s122
          %s125 = sshll.u32 %s117, 4
          %s126 = int_to_ptr.vmem [resolvable:$true] %s125
          %128 = dma.hbm_to_vmem [thread:$0]  %s123, 128, %s126, %s114
        $region24: #{tpu_custom_call.1} parent=19 // pred_fallthru
          _
      $region20: #{tpu_custom_call.1} parent=5 // pred_fallthru
        _
      %p129 = scmp.le.s32.totalorder 1, %s15
      %p130 = scmp.lt.s32.totalorder %s15, 3
      %p131 = pnand %p129, %p130
      %p132 = pneg %p131
      // Predicated region
      $region25: #{tpu_custom_call.1} parent=5 // pred_check
        _
      $region26: #{tpu_custom_call.1} parent=5 // pred_check_branch
        %134 = sbr.rel (%p131) target = $region28
      $region27: #{tpu_custom_call.1} parent=5 // pred_region
        %s135 = ssub.s32 %s15, 1
        %s136 = sand.u32 %s49, 1
        %s137 = scalar_lea.sflag [#allocation4], %s136
        %s138 = sand.u32 %s49, 1
        %s139 = smul.addr %s138, 8
        %s140 = scalar_lea.vmem [#allocation3], %s139
        // Predicated region
        $region29: #{tpu_custom_call.1} parent=27 // pred_check
          %p141 = pneg %p62
        $region30: #{tpu_custom_call.1} parent=27 // pred_check_branch
          %143 = sbr.rel (%p141) target = $region32
        $region31: #{tpu_custom_call.1} parent=27 // pred_region
          %144 = dma.done %s137, 128
        $region32: #{tpu_custom_call.1} parent=27 // pred_fallthru
          _
        %p145 = pneg %p36
        %p146 = pneg %p33
        %s147 = sand.u32 %s49, 1
        %s148 = scalar_lea.sflag [#allocation4], %s147
        %s149 = sand.u32 %s49, 1
        %s150 = smul.addr %s149, 8
        %s151 = scalar_lea.vmem [#allocation3], %s150
        %p152 = pneg %p62
        %p153 = pneg %p59
        %p154 = pneg %p88
        %p155 = pneg %p85
        %s156 = sand.u32 %s75, 1
        %s157 = scalar_lea.sflag [#allocation5], %s156
        %s158 = sand.u32 %s75, 1
        %s159 = smul.addr %s158, 8
        %s160 = scalar_lea.vmem [#allocation6], %s159
        %v161 = vld [vmem:[%s140] sm:$0xff]
        %v163 = vcombine.high %v161, %v161
        %165 = vmatprep.subr.mxu0 %v163
        %166 = vmatpush1.xpose.msra.mxu0 %v161
        %167 = vmatprep.subr.mxu0 0.0
        %168 = vmatpush1.xpose.msra.mxu0 0.0
        %169 = vmatprep.subr.mxu0 0.0
        %170 = vmatpush1.xpose.msra.mxu0 0.0
        %171 = vmatprep.subr.mxu0 0.0
        %172 = vmatpush1.xpose.msra.mxu0 0.0
        %173 = vmatprep.subr.mxu0 0.0
        %174 = vmatpush1.xpose.msra.mxu0 0.0
        %175 = vmatprep.subr.mxu0 0.0
        %176 = vmatpush1.xpose.msra.mxu0 0.0
        %177 = vmatprep.subr.mxu0 0.0
        %178 = vmatpush1.xpose.msra.mxu0 0.0
        %179 = vmatprep.subr.mxu0 0.0
        %180 = vmatpush1.xpose.msra.mxu0 0.0
        %181 = vmatprep.subr.mxu0 0.0
        %182 = vmatpush1.xpose.msra.mxu0 0.0
        %183 = vmatprep.subr.mxu0 0.0
        %184 = vmatpush1.xpose.msra.mxu0 0.0
        %185 = vmatprep.subr.mxu0 0.0
        %186 = vmatpush1.xpose.msra.mxu0 0.0
        %187 = vmatprep.subr.mxu0 0.0
        %188 = vmatpush1.xpose.msra.mxu0 0.0
        %189 = vmatprep.subr.mxu0 0.0
        %190 = vmatpush1.xpose.msra.mxu0 0.0
        %191 = vmatprep.subr.mxu0 0.0
        %192 = vmatpush1.xpose.msra.mxu0 0.0
        %193 = vmatprep.subr.mxu0 0.0
        %194 = vmatpush1.xpose.msra.mxu0 0.0
        %195 = vmatprep.subr.mxu0 0.0
        %196 = vmatpush1.xpose.msra.mxu0 0.0
        %197 = vmatprep.subr.mxu0 0.0
        %198 = vmatpush1.xpose.msra.mxu0 0.0
        %199 = vmatprep.subr.mxu0 0.0
        %200 = vmatpush1.xpose.msra.mxu0 0.0
        %201 = vmatprep.subr.mxu0 0.0
        %202 = vmatpush1.xpose.msra.mxu0 0.0
        %203 = vmatprep.subr.mxu0 0.0
        %204 = vmatpush1.xpose.msra.mxu0 0.0
        %205 = vmatprep.subr.mxu0 0.0
        %206 = vmatpush1.xpose.msra.mxu0 0.0
        %207 = vmatprep.subr.mxu0 0.0
        %208 = vmatpush1.xpose.msra.mxu0 0.0
        %209 = vmatprep.subr.mxu0 0.0
        %210 = vmatpush1.xpose.msra.mxu0 0.0
        %211 = vmatprep.subr.mxu0 0.0
        %212 = vmatpush1.xpose.msra.mxu0 0.0
        %213 = vmatprep.subr.mxu0 0.0
        %214 = vmatpush1.xpose.msra.mxu0 0.0
        %215 = vmatprep.subr.mxu0 0.0
        %216 = vmatpush1.xpose.msra.mxu0 0.0
        %217 = vmatprep.subr.mxu0 0.0
        %218 = vmatpush1.xpose.msra.mxu0 0.0
        %219 = vmatprep.subr.mxu0 0.0
        %220 = vmatpush1.xpose.msra.mxu0 0.0
        %221 = vmatprep.subr.mxu0 0.0
        %222 = vmatpush1.xpose.msra.mxu0 0.0
        %223 = vmatprep.subr.mxu0 0.0
        %224 = vmatpush1.xpose.msra.mxu0 0.0
        %225 = vmatprep.subr.mxu0 0.0
        %226 = vmatpush1.xpose.msra.mxu0 0.0
        %227 = vmatprep.subr.mxu0 0.0
        %228 = vmatpush1.xpose.msra.mxu0 0.0
        %229 = vmatprep.mubr.f32.mxu0 %v163
        %230 = vmatmul.mubr.f32.gmra.mrb[0].mxu0 %v161
        %v231 = vpop.f32.mrb[0].mxu0
        %v232 = vadd.f32 0.0, %v231
        %v233 = vpop.f32.mrb[0].mxu0
        %234 = vdwg.mxu0
        %vm235 = vcmask 27648
        %v236 = vsel %vm235, %v232, inf
        %237 = vmin.xlane.f32.xlu0 %v236
        %v238 = vpop.xlane.xlu0 %237
        %v239 = vsub.f32 %v238, %v232
        %v240 = vmul.f32 %v239, 1.442695
        %v241 = vpow.pop %v240
        %v242 = vsel %vm235, %v241, 0.0
        %243 = vadd.xlane.f32.xlu0 %v242
        %v244 = vpop.xlane.xlu0 %243
        %v245 = vrcp.pop %v244
        %v246 = vmul.f32 %v241, %v245
        %s247 = sld [smem:[#allocation2]]
        %v248 = vstv %s247
        %v249 = vmul.f32 %v248, %v246
        %vm250 = vcmask 31744
        %v252 = vsel %vm250, %v249, 0
        %vm254 = vcmask 1043456
        %v255 = vsel %vm254, %v161, 0
        %v257 = vsel %vm254, %v163, 0
        %259 = vmatprep.subr.mxu0 %v257
        %260 = vmatpush1.msra.mxu0 %v255
        %261 = vmatprep.subr.mxu0 0.0
        %262 = vmatpush1.msra.mxu0 0.0
        %263 = vmatprep.subr.mxu0 0.0
        %264 = vmatpush1.msra.mxu0 0.0
        %265 = vmatprep.subr.mxu0 0.0
        %266 = vmatpush1.msra.mxu0 0.0
        %267 = vmatprep.subr.mxu0 0.0
        %268 = vmatpush1.msra.mxu0 0.0
        %269 = vmatprep.subr.mxu0 0.0
        %270 = vmatpush1.msra.mxu0 0.0
        %271 = vmatprep.subr.mxu0 0.0
        %272 = vmatpush1.msra.mxu0 0.0
        %273 = vmatprep.subr.mxu0 0.0
        %274 = vmatpush1.msra.mxu0 0.0
        %275 = vmatprep.subr.mxu0 0.0
        %276 = vmatpush1.msra.mxu0 0.0
        %277 = vmatprep.subr.mxu0 0.0
        %278 = vmatpush1.msra.mxu0 0.0
        %279 = vmatprep.subr.mxu0 0.0
        %280 = vmatpush1.msra.mxu0 0.0
        %281 = vmatprep.subr.mxu0 0.0
        %282 = vmatpush1.msra.mxu0 0.0
        %283 = vmatprep.subr.mxu0 0.0
        %284 = vmatpush1.msra.mxu0 0.0
        %285 = vmatprep.subr.mxu0 0.0
        %286 = vmatpush1.msra.mxu0 0.0
        %287 = vmatprep.subr.mxu0 0.0
        %288 = vmatpush1.msra.mxu0 0.0
        %289 = vmatprep.subr.mxu0 0.0
        %290 = vmatpush1.msra.mxu0 0.0
        %291 = vmatprep.subr.mxu0 0.0
        %292 = vmatpush1.msra.mxu0 0.0
        %293 = vmatprep.subr.mxu0 0.0
        %294 = vmatpush1.msra.mxu0 0.0
        %295 = vmatprep.subr.mxu0 0.0
        %296 = vmatpush1.msra.mxu0 0.0
        %297 = vmatprep.subr.mxu0 0.0
        %298 = vmatpush1.msra.mxu0 0.0
        %299 = vmatprep.subr.mxu0 0.0
        %300 = vmatpush1.msra.mxu0 0.0
        %301 = vmatprep.subr.mxu0 0.0
        %302 = vmatpush1.msra.mxu0 0.0
        %303 = vmatprep.subr.mxu0 0.0
        %304 = vmatpush1.msra.mxu0 0.0
        %305 = vmatprep.subr.mxu0 0.0
        %306 = vmatpush1.msra.mxu0 0.0
        %307 = vmatprep.subr.mxu0 0.0
        %308 = vmatpush1.msra.mxu0 0.0
        %309 = vmatprep.subr.mxu0 0.0
        %310 = vmatpush1.msra.mxu0 0.0
        %311 = vmatprep.subr.mxu0 0.0
        %312 = vmatpush1.msra.mxu0 0.0
        %313 = vmatprep.subr.mxu0 0.0
        %314 = vmatpush1.msra.mxu0 0.0
        %315 = vmatprep.subr.mxu0 0.0
        %316 = vmatpush1.msra.mxu0 0.0
        %317 = vmatprep.subr.mxu0 0.0
        %318 = vmatpush1.msra.mxu0 0.0
        %319 = vmatprep.subr.mxu0 0.0
        %320 = vmatpush1.msra.mxu0 0.0
        %321 = vmatprep.subr.mxu0 0.0
        %322 = vmatpush1.msra.mxu0 0.0
        %323 = vmatprep.mubr.f32.mxu0 0.0
        %324 = vmatmul.mubr.f32.gmra.mrb[0].mxu0 %v252
        %v325 = vpop.f32.mrb[0].mxu0
        %v326 = vadd.f32 %v161, %v325
        %v327 = vpop.f32.mrb[0].mxu0
        %v328 = vadd.f32 %v163, %v327
        %329 = vdwg.mxu0
        %v332 = vcombine.low %v326, %v328
        %334 = vst [vmem:[%s160] sm:$0xff] %v332
        %s335 = sand.u32 %s75, 1
        %s336 = scalar_lea.sflag [#allocation5], %s335
        %s337 = sand.u32 %s75, 1
        %s338 = smul.addr %s337, 8
        %s339 = scalar_lea.vmem [#allocation6], %s338
        // Predicated region
        $region33: #{tpu_custom_call.1} parent=27 // pred_check
          %p340 = pneg %p85
        $region34: #{tpu_custom_call.1} parent=27 // pred_check_branch
          %342 = sbr.rel (%p340) target = $region36
        $region35: #{tpu_custom_call.1} parent=27 // pred_region
          %s344 = ssub.s32 128, 128
          %345 = vsyncadd %s336, %s344
          %s346 = smul.addr %s20, 2
          %s347 = smul.addr %s346, 64
          %s348 = scalar_lea.hbm %s2, %s347
          %s350 = sshll.u32 %s339, 4
          %s351 = int_to_ptr.vmem [resolvable:$true] %s350
          %353 = dma.vmem_to_hbm [thread:$0]  %s351, 128, %s348, %s336
        $region36: #{tpu_custom_call.1} parent=27 // pred_fallthru
          _
      $region28: #{tpu_custom_call.1} parent=5 // pred_fallthru
        _
      %p354 = scmp.le.s32.totalorder 2, %s15
      // Predicated region
      $region37: #{tpu_custom_call.1} parent=5 // pred_check
        %p355 = pneg %p354
      $region38: #{tpu_custom_call.1} parent=5 // pred_check_branch
        %357 = sbr.rel (%p355) target = $region40
      $region39: #{tpu_custom_call.1} parent=5 // pred_region
        %s358 = ssub.s32 %s15, 2
        // Predicated region
        $region41: #{tpu_custom_call.1} parent=39 // pred_check
          %p359 = pneg %p91
        $region42: #{tpu_custom_call.1} parent=39 // pred_check_branch
          %361 = sbr.rel (%p359) target = $region44
        $region43: #{tpu_custom_call.1} parent=39 // pred_region
          %s362 = sand.u32 %s76, 1
          %s363 = scalar_lea.sflag [#allocation5], %s362
          %s364 = sand.u32 %s76, 1
          %s365 = smul.addr %s364, 8
          %s366 = scalar_lea.vmem [#allocation6], %s365
          %367 = dma.done %s363, 128
        $region44: #{tpu_custom_call.1} parent=39 // pred_fallthru
          _
      $region40: #{tpu_custom_call.1} parent=5 // pred_fallthru
        _
    $region6: #{tpu_custom_call.1} parent=1 // loop_footer
      %s19 = sadd.s32 1, %s15
    $region7: #{tpu_custom_call.1} parent=1 // loop_footer_branch
      %14 = sbr.rel target = $region3
    $region8: #{tpu_custom_call.1} parent=1 // loop_exit
      _
    %368 = vsyncpa [#allocation4], 1
    %s369 = scalar_lea.sflag [#allocation4], 1
    %370 = vsyncpa %s369, 1
    %371 = vsyncpa [#allocation5], 1
    %s372 = scalar_lea.sflag [#allocation5], 1
    %373 = vsyncpa %s372, 1

</llo_original>
